<compile_context>
chip_gen: v6e
topology: v6e:2x2x1
jax: 0.10.0
libtpu: 0.0.40
codegen_flags: <defaults>
</compile_context>

<pallas_src>
import functools

import jax
import jax.numpy as jnp
from jax.experimental import pallas as pl
from jax.experimental.pallas import tpu as pltpu


def _bahdanau_kernel(q_ref, k_ref, waT_ref, uaT_ref, bias_ref, va_ref,
                     ctx_ref, w_ref, *, s_valid):
    # q_ref   : (TB, H)      raw query rows (middle dim squeezed outside)
    # k_ref   : (TB, Sp, H)  keys tile (Sp = S padded to a multiple of 8)
    # waT_ref : (H, H)       Wa^T, uaT_ref: (H, H) Ua^T   (compute dtype)
    # bias_ref: (1, H)       Wa_b + Ua_b (f32), va_ref: (1, H) Va weight row (f32)
    TB, Sp, H = k_ref.shape
    cdt = k_ref.dtype
    f32 = jnp.float32

    k = k_ref[...]                                              # (TB, Sp, H) cdt

    # Wa(query) + combined bias: small (TB, H) @ (H, H) MXU matmul, f32 acc.
    qW = jnp.dot(q_ref[...].astype(cdt), waT_ref[...],
                 preferred_element_type=f32) + bias_ref[...]    # (TB, H) f32

    # Ua(keys): flatten the whole batch tile into one big MXU matmul.
    # Sp % 8 == 0 keeps this reshape layout-free (no VMEM copy).
    kU = jnp.dot(k.reshape(TB * Sp, H), uaT_ref[...],
                 preferred_element_type=f32).reshape(TB, Sp, H)

    e = jnp.tanh(qW[:, None, :] + kU)                           # (TB, Sp, H) f32

    # scores = Va(e); Va bias dropped (softmax is shift-invariant).
    # Lane-axis multiply + reduce: no XLU transpose of the tanh result.
    scores = jnp.sum(e * va_ref[...][None, :, :], axis=-1)      # (TB, Sp) f32

    if s_valid < Sp:  # mask padded sequence columns out of the softmax
        col = jax.lax.broadcasted_iota(jnp.int32, (TB, Sp), 1)
        scores = jnp.where(col < s_valid, scores, -1e30)

    # Softmax over the sequence (lane) axis.
    m = jnp.max(scores, axis=-1, keepdims=True)
    p = jnp.exp(scores - m)
    denom = jnp.sum(p, axis=-1, keepdims=True)
    use_approx = jnp.dtype(cdt) != jnp.dtype(jnp.float32)
    weights = p * pl.reciprocal(denom, approx=use_approx)       # (TB, Sp) f32

    # context = sum_s weights * keys: VPU multiply + sublane (XLU) reduce
    # instead of an M=1 matvec through the MXU weight path.
    ctx = jnp.sum(weights[:, :, None] * k, axis=1)              # (TB, H) f32

    ctx_ref[...] = ctx.astype(ctx_ref.dtype)
    w_ref[...] = weights.astype(w_ref.dtype)


def _round_up(x, m):
    return ((x + m - 1) // m) * m


def _vmem_budget():
    """(tile working-set budget, vmem_limit_bytes) — generation aware."""
    try:
        cap = int(pltpu.get_tpu_info().vmem_capacity_bytes)
    except Exception:
        cap = 64 * 1024 * 1024            # conservative: v7x physical VMEM
    budget = int(cap * 0.60)
    limit = min(int(cap * 0.85), 112 * 1024 * 1024)
    return budget, limit


def _pick_tb(seq_p, hidden, key_bytes, budget_bytes):
    """Largest sublane-aligned batch tile whose working set fits the budget."""
    # Grid-invariant residents: Wa^T, Ua^T (double-buffered by default) + misc.
    resident = 2 * 2 * hidden * hidden * key_bytes + 4 * 4 * hidden + (1 << 16)
    # Per batch row per step: double-buffered keys + q/ctx/weights blocks
    # + ~3 f32 (Sp, H) intermediates (kU, e, weighted keys).
    per_row = (2 * seq_p * hidden * key_bytes
               + 3 * seq_p * hidden * 4
               + 2 * (2 * hidden + seq_p) * 4)
    tb = int(max(1, (budget_bytes - resident) // max(per_row, 1)))
    return max(8, (tb // 8) * 8)


def bahdanau_attention(query, keys, params, *, tb=None,
                       compute_dtype=jnp.bfloat16):
    """query: (B, 1, H), keys: (B, S, H) -> (context (B, 1, H), weights (B, 1, S))."""
    B, _, H = query.shape
    _, S, _ = keys.shape
    cdt = jnp.dtype(compute_dtype)
    key_bytes = cdt.itemsize

    budget, vmem_limit = _vmem_budget()

    Sp = _round_up(S, 8)          # keeps the in-kernel flatten layout-free
    B8 = _round_up(B, 8)

    if tb is None:
        TB = min(_pick_tb(Sp, H, key_bytes, budget), B8)
        # Keep >= 2 grid steps when the batch allows it (v7x: 2 TensorCores).
        if TB >= B8 and B8 >= 16:
            TB = _round_up(B8 // 2, 8)
    else:
        TB = min(_round_up(max(1, int(tb)), 8), B8)
    Bp = _round_up(B8, TB)

    # Squeeze the degenerate middle dim -> sublane-dense (Bp, H)/(Bp, Sp) blocks.
    q2 = query.reshape(B, H)
    if Bp != B:
        q2 = jnp.pad(q2, ((0, Bp - B), (0, 0)))
    keys_p = keys
    if Bp != B or Sp != S:
        keys_p = jnp.pad(keys, ((0, Bp - B), (0, Sp - S), (0, 0)))
    keys_p = keys_p.astype(cdt)   # dominant HBM stream in the compute dtype

    waT = params["Wa_w"].T.astype(cdt)                     # kernel does x @ Wa^T
    uaT = params["Ua_w"].T.astype(cdt)                     # kernel does x @ Ua^T
    bias = (params["Wa_b"] + params["Ua_b"]).reshape(1, H).astype(jnp.float32)
    va = params["Va_w"].reshape(1, H).astype(jnp.float32)
    # Va_b intentionally dropped: softmax is shift-invariant.

    const2d = lambda b: (0, 0)
    grid_spec = pltpu.PrefetchScalarGridSpec(
        num_scalar_prefetch=0,
        grid=(Bp // TB,),
        in_specs=[
            pl.BlockSpec((TB, H), lambda b: (b, 0)),         # query rows
            pl.BlockSpec((TB, Sp, H), lambda b: (b, 0, 0)),  # keys tile
            pl.BlockSpec((H, H), const2d),                   # Wa^T (grid-invariant)
            pl.BlockSpec((H, H), const2d),                   # Ua^T (grid-invariant)
            pl.BlockSpec((1, H), const2d),                   # Wa_b + Ua_b
            pl.BlockSpec((1, H), const2d),                   # Va weight row
        ],
        out_specs=[
            pl.BlockSpec((TB, H), lambda b: (b, 0)),         # context rows
            pl.BlockSpec((TB, Sp), lambda b: (b, 0)),        # attention weights
        ],
    )

    ctx, w = pl.pallas_call(
        functools.partial(_bahdanau_kernel, s_valid=S),
        out_shape=(
            jax.ShapeDtypeStruct((Bp, H), query.dtype),
            jax.ShapeDtypeStruct((Bp, Sp), query.dtype),
        ),
        grid_spec=grid_spec,
        compiler_params=pltpu.CompilerParams(
            dimension_semantics=("parallel",),   # batch tiles shard across TCs
            vmem_limit_bytes=vmem_limit,
        ),
    )(q2, keys_p, waT, uaT, bias, va)

    context = ctx[:B].reshape(B, 1, H)
    weights = w[:B, :S].reshape(B, 1, S)
    return context, weights


def bahdanau_reference(query, keys, params):
    """Plain-JAX reference matching the PyTorch forward exactly."""
    qW = query @ params["Wa_w"].T + params["Wa_b"]                   # (B, 1, H)
    kU = keys @ params["Ua_w"].T + params["Ua_b"]                    # (B, S, H)
    scores = jnp.tanh(qW + kU) @ params["Va_w"].T + params["Va_b"]   # (B, S, 1)
    scores = jnp.transpose(scores, (0, 2, 1))                        # (B, 1, S)
    weights = jax.nn.softmax(scores, axis=-1)
    context = jnp.einsum("bts,bsh->bth", weights, keys)              # bmm
    return context, weights


def init_params(key, hidden_size):
    k = jax.random.split(key, 6)
    bound = 1.0 / jnp.sqrt(hidden_size)
    return {
        "Wa_w": jax.random.uniform(k[0], (hidden_size, hidden_size), jnp.float32, -bound, bound),
        "Wa_b": jax.random.uniform(k[1], (hidden_size,), jnp.float32, -bound, bound),
        "Ua_w": jax.random.uniform(k[2], (hidden_size, hidden_size), jnp.float32, -bound, bound),
        "Ua_b": jax.random.uniform(k[3], (hidden_size,), jnp.float32, -bound, bound),
        "Va_w": jax.random.uniform(k[4], (1, hidden_size), jnp.float32, -bound, bound),
        "Va_b": jax.random.uniform(k[5], (1,), jnp.float32, -bound, bound),
    }


if __name__ == "__main__":
    B, S, H = 16, 8, 32
    key = jax.random.PRNGKey(0)
    kq, kk, kp = jax.random.split(key, 3)

    query = jax.random.normal(kq, (B, 1, H), jnp.float32)
    keys = jax.random.normal(kk, (B, S, H), jnp.float32)
    params = init_params(kp, H)

    ctx_ref, w_ref = bahdanau_reference(query, keys, params)

    # Default path: bf16 MXU operands, auto batch tile (-> 2 grid steps here).
    ctx, w = bahdanau_attention(query, keys, params)
    ctx, w = jax.block_until_ready((ctx, w))
    assert ctx.shape == (B, 1, H) and w.shape == (B, 1, S)
    assert jnp.allclose(ctx, ctx_ref, atol=5e-2, rtol=5e-2), "bf16 context mismatch"
    assert jnp.allclose(w, w_ref, atol=2e-2, rtol=5e-2), "bf16 weights mismatch"

    # Exact f32 path matches the PyTorch/JAX reference tightly.
    ctx32, w32 = bahdanau_attention(query, keys, params, tb=8,
                                    compute_dtype=jnp.float32)
    ctx32, w32 = jax.block_until_ready((ctx32, w32))
    assert jnp.allclose(ctx32, ctx_ref, atol=1e-4, rtol=1e-4)
    assert jnp.allclose(w32, w_ref, atol=1e-4, rtol=1e-4)

    # Ragged shapes exercise the batch/sequence padding + softmax masking path.
    Br, Sr = 3, 5
    qr = jax.random.normal(jax.random.PRNGKey(1), (Br, 1, H), jnp.float32)
    kr = jax.random.normal(jax.random.PRNGKey(2), (Br, Sr, H), jnp.float32)
    ctx_r, w_r = bahdanau_attention(qr, kr, params)
    ctx_r, w_r = jax.block_until_ready((ctx_r, w_r))
    ctx_rr, w_rr = bahdanau_reference(qr, kr, params)
    assert ctx_r.shape == (Br, 1, H) and w_r.shape == (Br, 1, Sr)
    assert jnp.allclose(ctx_r, ctx_rr, atol=5e-2, rtol=5e-2)
    assert jnp.allclose(w_r, w_rr, atol=2e-2, rtol=5e-2)

    print("KERNEL_OK")
</pallas_src>

<mosaic_0001>
module attributes {stable_mosaic.version = 11 : i64} {
  func.func @_bahdanau_kernel(%arg0: i32, %arg1: memref<8x32xf32, #tpu.memory_space<vmem>>, %arg2: memref<8x8x32xbf16, #tpu.memory_space<vmem>>, %arg3: memref<32x32xbf16, #tpu.memory_space<vmem>>, %arg4: memref<32x32xbf16, #tpu.memory_space<vmem>>, %arg5: memref<1x32xf32, #tpu.memory_space<vmem>>, %arg6: memref<1x32xf32, #tpu.memory_space<vmem>>, %arg7: memref<8x32xf32, #tpu.memory_space<vmem>>, %arg8: memref<8x8xf32, #tpu.memory_space<vmem>>) attributes {dimension_semantics = [#tpu.dimension_semantics<parallel>], iteration_bounds = array<i64: 2>, scalar_prefetch = 0 : i64, scratch_operands = 0 : i64, tpu.core_type = #tpu.core_type<tc>, window_params = [{transform_indices = @transform_0, window_bounds = array<i64: 8, 32>}, {transform_indices = @transform_1, window_bounds = array<i64: 8, 8, 32>}, {pipeline_mode = #tpu.pipeline_mode<synchronous>, transform_indices = @transform_2, window_bounds = array<i64: 32, 32>}, {pipeline_mode = #tpu.pipeline_mode<synchronous>, transform_indices = @transform_3, window_bounds = array<i64: 32, 32>}, {pipeline_mode = #tpu.pipeline_mode<synchronous>, transform_indices = @transform_4, window_bounds = array<i64: 1, 32>}, {pipeline_mode = #tpu.pipeline_mode<synchronous>, transform_indices = @transform_5, window_bounds = array<i64: 1, 32>}, {transform_indices = @transform_6, window_bounds = array<i64: 8, 32>}, {transform_indices = @transform_7, window_bounds = array<i64: 8, 8>}]} {
    %c0 = arith.constant 0 : index
    %c0_0 = arith.constant 0 : index
    %c0_1 = arith.constant 0 : index
    %0 = vector.load %arg2[%c0, %c0_0, %c0_1] : memref<8x8x32xbf16, #tpu.memory_space<vmem>>, vector<8x8x32xbf16>
    %c0_2 = arith.constant 0 : index
    %c0_3 = arith.constant 0 : index
    %1 = vector.load %arg1[%c0_2, %c0_3] : memref<8x32xf32, #tpu.memory_space<vmem>>, vector<8x32xf32>
    %2 = arith.truncf %1 : vector<8x32xf32> to vector<8x32xbf16>
    %c0_4 = arith.constant 0 : index
    %c0_5 = arith.constant 0 : index
    %3 = vector.load %arg3[%c0_4, %c0_5] : memref<32x32xbf16, #tpu.memory_space<vmem>>, vector<32x32xbf16>
    %cst = arith.constant dense<0.000000e+00> : vector<8x32xf32>
    %4 = tpu.matmul %2, %3, %cst {dimension_numbers = #tpu.dot_dimension_numbers<[1], [0], [0], [1], [0, 0, 1, 1], [], []>} : vector<8x32xbf16>, vector<32x32xbf16>, vector<8x32xf32> -> vector<8x32xf32>
    %c0_6 = arith.constant 0 : index
    %c0_7 = arith.constant 0 : index
    %5 = vector.load %arg5[%c0_6, %c0_7] : memref<1x32xf32, #tpu.memory_space<vmem>>, vector<1x32xf32>
    %6 = vector.broadcast %5 : vector<1x32xf32> to vector<8x32xf32>
    %7 = arith.addf %4, %6 : vector<8x32xf32>
    %8 = vector.shape_cast %0 : vector<8x8x32xbf16> to vector<64x32xbf16>
    %c0_8 = arith.constant 0 : index
    %c0_9 = arith.constant 0 : index
    %9 = vector.load %arg4[%c0_8, %c0_9] : memref<32x32xbf16, #tpu.memory_space<vmem>>, vector<32x32xbf16>
    %cst_10 = arith.constant dense<0.000000e+00> : vector<64x32xf32>
    %10 = tpu.matmul %8, %9, %cst_10 {dimension_numbers = #tpu.dot_dimension_numbers<[1], [0], [0], [1], [0, 0, 1, 1], [], []>} : vector<64x32xbf16>, vector<32x32xbf16>, vector<64x32xf32> -> vector<64x32xf32>
    %11 = vector.shape_cast %10 : vector<64x32xf32> to vector<8x8x32xf32>
    %12 = vector.shape_cast %7 : vector<8x32xf32> to vector<8x1x32xf32>
    %13 = vector.broadcast %12 : vector<8x1x32xf32> to vector<8x8x32xf32>
    %14 = arith.addf %13, %11 : vector<8x8x32xf32>
    %15 = math.tanh %14 : vector<8x8x32xf32>
    %c0_11 = arith.constant 0 : index
    %c0_12 = arith.constant 0 : index
    %16 = vector.load %arg6[%c0_11, %c0_12] : memref<1x32xf32, #tpu.memory_space<vmem>>, vector<1x32xf32>
    %17 = vector.shape_cast %16 : vector<1x32xf32> to vector<1x1x32xf32>
    %18 = vector.broadcast %17 : vector<1x1x32xf32> to vector<8x8x32xf32>
    %19 = arith.mulf %15, %18 : vector<8x8x32xf32>
    %cst_13 = arith.constant dense<0.000000e+00> : vector<8x8xf32>
    %20 = vector.multi_reduction <add>, %19, %cst_13 [2] : vector<8x8x32xf32> to vector<8x8xf32>
    %cst_14 = arith.constant dense<0xFF800000> : vector<8xf32>
    %21 = vector.multi_reduction <maximumf>, %20, %cst_14 [1] : vector<8x8xf32> to vector<8xf32>
    %22 = vector.shape_cast %21 : vector<8xf32> to vector<8x1xf32>
    %23 = vector.broadcast %22 : vector<8x1xf32> to vector<8x8xf32>
    %24 = arith.subf %20, %23 : vector<8x8xf32>
    %25 = math.exp %24 : vector<8x8xf32>
    %cst_15 = arith.constant dense<0.000000e+00> : vector<8xf32>
    %26 = vector.multi_reduction <add>, %25, %cst_15 [1] : vector<8x8xf32> to vector<8xf32>
    %27 = vector.shape_cast %26 : vector<8xf32> to vector<8x1xf32>
    %28 = tpu.reciprocal %27 {approx = true} : vector<8x1xf32> -> vector<8x1xf32>
    %29 = vector.broadcast %28 : vector<8x1xf32> to vector<8x8xf32>
    %30 = arith.mulf %25, %29 : vector<8x8xf32>
    %31 = vector.shape_cast %30 : vector<8x8xf32> to vector<8x8x1xf32>
    %32 = arith.extf %0 : vector<8x8x32xbf16> to vector<8x8x32xf32>
    %33 = vector.broadcast %31 : vector<8x8x1xf32> to vector<8x8x32xf32>
    %34 = arith.mulf %33, %32 : vector<8x8x32xf32>
    %cst_16 = arith.constant dense<0.000000e+00> : vector<8x32xf32>
    %35 = vector.multi_reduction <add>, %34, %cst_16 [1] : vector<8x8x32xf32> to vector<8x32xf32>
    %c0_17 = arith.constant 0 : index
    %c0_18 = arith.constant 0 : index
    %36 = vector.load %arg7[%c0_17, %c0_18] : memref<8x32xf32, #tpu.memory_space<vmem>>, vector<8x32xf32>
    tpu.vector_store %arg7[%c0_17, %c0_18], %35 {strides = array<i32>} : memref<8x32xf32, #tpu.memory_space<vmem>>, vector<8x32xf32>,
    %c0_19 = arith.constant 0 : index
    %c0_20 = arith.constant 0 : index
    %37 = vector.load %arg8[%c0_19, %c0_20] : memref<8x8xf32, #tpu.memory_space<vmem>>, vector<8x8xf32>
    tpu.vector_store %arg8[%c0_19, %c0_20], %30 {strides = array<i32>} : memref<8x8xf32, #tpu.memory_space<vmem>>, vector<8x8xf32>,
    return
  }
  func.func @transform_0(%arg0: i32) -> (i32, i32) {
    %c0_i32 = arith.constant 0 : i32
    %c0_i32_0 = arith.constant 0 : i32
    return %arg0, %c0_i32 : i32, i32
  }
  func.func @transform_1(%arg0: i32) -> (i32, i32, i32) {
    %c0_i32 = arith.constant 0 : i32
    %c0_i32_0 = arith.constant 0 : i32
    %c0_i32_1 = arith.constant 0 : i32
    return %arg0, %c0_i32, %c0_i32_0 : i32, i32, i32
  }
  func.func @transform_2(%arg0: i32) -> (i32, i32) {
    %c0_i32 = arith.constant 0 : i32
    %c0_i32_0 = arith.constant 0 : i32
    %c0_i32_1 = arith.constant 0 : i32
    return %c0_i32, %c0_i32_0 : i32, i32
  }
  func.func @transform_3(%arg0: i32) -> (i32, i32) {
    %c0_i32 = arith.constant 0 : i32
    %c0_i32_0 = arith.constant 0 : i32
    %c0_i32_1 = arith.constant 0 : i32
    return %c0_i32, %c0_i32_0 : i32, i32
  }
  func.func @transform_4(%arg0: i32) -> (i32, i32) {
    %c0_i32 = arith.constant 0 : i32
    %c0_i32_0 = arith.constant 0 : i32
    %c0_i32_1 = arith.constant 0 : i32
    return %c0_i32, %c0_i32_0 : i32, i32
  }
  func.func @transform_5(%arg0: i32) -> (i32, i32) {
    %c0_i32 = arith.constant 0 : i32
    %c0_i32_0 = arith.constant 0 : i32
    %c0_i32_1 = arith.constant 0 : i32
    return %c0_i32, %c0_i32_0 : i32, i32
  }
  func.func @transform_6(%arg0: i32) -> (i32, i32) {
    %c0_i32 = arith.constant 0 : i32
    %c0_i32_0 = arith.constant 0 : i32
    return %arg0, %c0_i32 : i32, i32
  }
  func.func @transform_7(%arg0: i32) -> (i32, i32) {
    %c0_i32 = arith.constant 0 : i32
    %c0_i32_0 = arith.constant 0 : i32
    return %arg0, %c0_i32 : i32, i32
  }
}

</mosaic_0001>

<llo_original>
// kernel: tpu_custom_call.1
$region0: #{tpu_custom_call.1}
  #allocation0 [shape = 'u32[]', space=smem, size = 0x4, offset = 0x4, fixed_abs, tag = 'smem constant byte address 0x4 - core index']
  #allocation1 [shape = 'u32[144,128]{1,0:T(1,128)}', space=vmem, size = 0x12000, scoped, tag = 'internal scratch']
  %s0 = inlined_call_operand.hbm [shape: f32[16,32], index: 0, kind: input, shape index: {}]
  %s1 = inlined_call_operand.hbm [shape: bf16[16,8,32], index: 1, kind: input, shape index: {}]
  %s2 = inlined_call_operand.hbm [shape: bf16[32,32], index: 2, kind: input, shape index: {}]
  %s3 = inlined_call_operand.hbm [shape: bf16[32,32], index: 3, kind: input, shape index: {}]
  %s4 = inlined_call_operand.vmem [shape: f32[1,32], index: 4, kind: input, shape index: {}]
  %s5 = inlined_call_operand.vmem [shape: f32[1,32], index: 5, kind: input, shape index: {}]
  %s6 = inlined_call_operand.hbm [shape: f32[16,32], index: 6, kind: output, shape index: {0}]
  %s7 = inlined_call_operand.vmem [shape: f32[16,8], index: 7, kind: output, shape index: {1}]
  %8 = xla_tuple %s6, %s7
  %s9 = sld [smem:[#allocation0]]
  $region81: #{tpu_custom_call.1} parent=0
    _
  %s11 = ssub.s32 1, %s9
  %s12 = scalar_select 0, %s11, %s9
  $region1: #{tpu_custom_call.1} parent=0
    #allocation2 [shape = 'u8[8192]{0}', space=vmem, size = 0x2000, scoped, tag = 'input window, operand 0']
    #allocation3 [shape = 's32[2]{0}', space=sflag, size = 0x8, scoped, tag = 'scoped memory for tpu_custom_call.1']
    #allocation4 [shape = 's32[2]{0}', space=sflag, size = 0x8, scoped, tag = 'scoped memory for tpu_custom_call.1']
    #allocation5 [shape = 'u8[32768]{0}', space=vmem, size = 0x8000, scoped, tag = 'input window, operand 1']
    #allocation6 [shape = 's32[2]{0}', space=sflag, size = 0x8, scoped, tag = 'scoped memory for tpu_custom_call.1']
    #allocation7 [shape = 'u8[8192]{0}', space=vmem, size = 0x2000, scoped, tag = 'input window, operand 2, single buffered']
    #allocation8 [shape = 'u8[8192]{0}', space=vmem, size = 0x2000, scoped, tag = 'input window, operand 3, single buffered']
    #allocation9 [shape = 's32[1]{0}', space=sflag, size = 0x4, scoped, tag = 'scoped memory for tpu_custom_call.1']
    #allocation10 [shape = 'u8[8192]{0}', space=vmem, size = 0x2000, scoped, tag = 'output window, operand 0']
    %13 = vsyncpa [#allocation3], 0
    %s14 = scalar_lea.sflag [#allocation3], 1
    %15 = vsyncpa %s14, 0
    %16 = vsyncpa [#allocation6], 0
    %s17 = scalar_lea.sflag [#allocation6], 1
    %18 = vsyncpa %s17, 0
    %19 = vsyncpa [#allocation9], 0
    %20 = vsyncpa [#allocation4], 0
    %s21 = scalar_lea.sflag [#allocation4], 1
    %22 = vsyncpa %s21, 0
    loop: start=0, step=1, limit=4
    $region2: #{tpu_custom_call.1} parent=1 // loop_pre_header
      _
    $region3: #{tpu_custom_call.1} parent=1 // loop_header
      %s24 = sphi 0, %s28
      %p25 = scmp.ge.s32.totalorder %s24, 4
      %s34 = sphi 0, %s36
      %s37 = sphi 0, %s34
      %s38 = sphi 0, %s37
      %s54 = sphi 0, %s38
      %s60 = sphi 0, %s62
      %s63 = sphi 0, %s60
      %s64 = sphi 0, %s63
      %s80 = sphi 0, %s64
      %s84 = sphi 0, %s84
      %s86 = sphi 0, %s84
      %s87 = sphi 0, %s86
      %s101 = sphi 0, %s87
      %s105 = sphi 0, %s105
      %s107 = sphi 0, %s105
      %s108 = sphi 0, %s107
      %s122 = sphi 0, %s108
      %s126 = sphi 0, %s126
      %s128 = sphi 0, %s126
      %s129 = sphi 0, %s128
      %s143 = sphi 0, %s129
      %s147 = sphi 0, %s147
      %s149 = sphi 0, %s147
      %s150 = sphi 0, %s149
      %s164 = sphi 0, %s150
      %s170 = sphi 0, %s172
      %s173 = sphi 0, %s170
      %s174 = sphi 0, %s173
      %s190 = sphi 0, %s174
      %s196 = sphi 0, %s198
      %s199 = sphi 0, %s196
      %s200 = sphi 0, %s199
      %s216 = sphi 0, %s200
    $region4: #{tpu_custom_call.1} parent=1 // loop_header_branch
      %27 = sbr.rel (%p25) target = $region8
    $region5: #{tpu_custom_call.1} parent=1 // loop_body
      %s29 = ssub.s32 %s24, 1
      %s30 = ssub.s32 %s24, 2
      %s31 = sadd.s32 %s24, 1
      %s32 = ssub.s32 %s24, %s31
      %p33 = scmp.eq.s32.totalorder %s32, 0
      %s35 = sadd.s32 %s34, 1
      %s36 = scalar_select %p33, %s34, %s35
      %p39 = pneg %p33
      %p40 = scmp.eq.s32.totalorder %s24, 1
      %p41 = por %p39, %p40
      %p42 = scmp.ne.s32.totalorder %s34, %s37
      %p43 = scmp.eq.s32.totalorder %s24, 0
      %p44 = por %p42, %p43
      %p45 = scmp.ne.s32.totalorder %s34, %s37
      %p46 = scmp.eq.s32.totalorder %s29, 1
      %p47 = por %p45, %p46
      %p48 = scmp.ne.s32.totalorder %s37, %s38
      %p49 = scmp.eq.s32.totalorder %s29, 0
      %p50 = por %p48, %p49
      %p51 = scmp.ne.s32.totalorder %s37, %s38
      %p52 = scmp.eq.s32.totalorder %s30, 1
      %p53 = por %p51, %p52
      %p55 = scmp.ne.s32.totalorder %s38, %s54
      %p56 = scmp.eq.s32.totalorder %s30, 0
      %p57 = por %p55, %p56
      %s58 = ssub.s32 %s24, %s31
      %p59 = scmp.eq.s32.totalorder %s58, 0
      %s61 = sadd.s32 %s60, 1
      %s62 = scalar_select %p59, %s60, %s61
      %p65 = pneg %p59
      %p66 = scmp.eq.s32.totalorder %s24, 1
      %p67 = por %p65, %p66
      %p68 = scmp.ne.s32.totalorder %s60, %s63
      %p69 = scmp.eq.s32.totalorder %s24, 0
      %p70 = por %p68, %p69
      %p71 = scmp.ne.s32.totalorder %s60, %s63
      %p72 = scmp.eq.s32.totalorder %s29, 1
      %p73 = por %p71, %p72
      %p74 = scmp.ne.s32.totalorder %s63, %s64
      %p75 = scmp.eq.s32.totalorder %s29, 0
      %p76 = por %p74, %p75
      %p77 = scmp.ne.s32.totalorder %s63, %s64
      %p78 = scmp.eq.s32.totalorder %s30, 1
      %p79 = por %p77, %p78
      %p81 = scmp.ne.s32.totalorder %s64, %s80
      %p82 = scmp.eq.s32.totalorder %s30, 0
      %p83 = por %p81, %p82
      %s85 = sadd.s32 %s84, 1
      %p88 = scmp.eq.s32.totalorder %s24, 1
      %p89 = scmp.ne.s32.totalorder %s84, %s86
      %p90 = scmp.eq.s32.totalorder %s24, 0
      %p91 = por %p89, %p90
      %p92 = scmp.ne.s32.totalorder %s84, %s86
      %p93 = scmp.eq.s32.totalorder %s29, 1
      %p94 = por %p92, %p93
      %p95 = scmp.ne.s32.totalorder %s86, %s87
      %p96 = scmp.eq.s32.totalorder %s29, 0
      %p97 = por %p95, %p96
      %p98 = scmp.ne.s32.totalorder %s86, %s87
      %p99 = scmp.eq.s32.totalorder %s30, 1
      %p100 = por %p98, %p99
      %p102 = scmp.ne.s32.totalorder %s87, %s101
      %p103 = scmp.eq.s32.totalorder %s30, 0
      %p104 = por %p102, %p103
      %s106 = sadd.s32 %s105, 1
      %p109 = scmp.eq.s32.totalorder %s24, 1
      %p110 = scmp.ne.s32.totalorder %s105, %s107
      %p111 = scmp.eq.s32.totalorder %s24, 0
      %p112 = por %p110, %p111
      %p113 = scmp.ne.s32.totalorder %s105, %s107
      %p114 = scmp.eq.s32.totalorder %s29, 1
      %p115 = por %p113, %p114
      %p116 = scmp.ne.s32.totalorder %s107, %s108
      %p117 = scmp.eq.s32.totalorder %s29, 0
      %p118 = por %p116, %p117
      %p119 = scmp.ne.s32.totalorder %s107, %s108
      %p120 = scmp.eq.s32.totalorder %s30, 1
      %p121 = por %p119, %p120
      %p123 = scmp.ne.s32.totalorder %s108, %s122
      %p124 = scmp.eq.s32.totalorder %s30, 0
      %p125 = por %p123, %p124
      %s127 = sadd.s32 %s126, 1
      %p130 = scmp.eq.s32.totalorder %s24, 1
      %p131 = scmp.ne.s32.totalorder %s126, %s128
      %p132 = scmp.eq.s32.totalorder %s24, 0
      %p133 = por %p131, %p132
      %p134 = scmp.ne.s32.totalorder %s126, %s128
      %p135 = scmp.eq.s32.totalorder %s29, 1
      %p136 = por %p134, %p135
      %p137 = scmp.ne.s32.totalorder %s128, %s129
      %p138 = scmp.eq.s32.totalorder %s29, 0
      %p139 = por %p137, %p138
      %p140 = scmp.ne.s32.totalorder %s128, %s129
      %p141 = scmp.eq.s32.totalorder %s30, 1
      %p142 = por %p140, %p141
      %p144 = scmp.ne.s32.totalorder %s129, %s143
      %p145 = scmp.eq.s32.totalorder %s30, 0
      %p146 = por %p144, %p145
      %s148 = sadd.s32 %s147, 1
      %p151 = scmp.eq.s32.totalorder %s24, 1
      %p152 = scmp.ne.s32.totalorder %s147, %s149
      %p153 = scmp.eq.s32.totalorder %s24, 0
      %p154 = por %p152, %p153
      %p155 = scmp.ne.s32.totalorder %s147, %s149
      %p156 = scmp.eq.s32.totalorder %s29, 1
      %p157 = por %p155, %p156
      %p158 = scmp.ne.s32.totalorder %s149, %s150
      %p159 = scmp.eq.s32.totalorder %s29, 0
      %p160 = por %p158, %p159
      %p161 = scmp.ne.s32.totalorder %s149, %s150
      %p162 = scmp.eq.s32.totalorder %s30, 1
      %p163 = por %p161, %p162
      %p165 = scmp.ne.s32.totalorder %s150, %s164
      %p166 = scmp.eq.s32.totalorder %s30, 0
      %p167 = por %p165, %p166
      %s168 = ssub.s32 %s24, %s31
      %p169 = scmp.eq.s32.totalorder %s168, 0
      %s171 = sadd.s32 %s170, 1
      %s172 = scalar_select %p169, %s170, %s171
      %p175 = pneg %p169
      %p176 = scmp.eq.s32.totalorder %s24, 1
      %p177 = por %p175, %p176
      %p178 = scmp.ne.s32.totalorder %s170, %s173
      %p179 = scmp.eq.s32.totalorder %s24, 0
      %p180 = por %p178, %p179
      %p181 = scmp.ne.s32.totalorder %s170, %s173
      %p182 = scmp.eq.s32.totalorder %s29, 1
      %p183 = por %p181, %p182
      %p184 = scmp.ne.s32.totalorder %s173, %s174
      %p185 = scmp.eq.s32.totalorder %s29, 0
      %p186 = por %p184, %p185
      %p187 = scmp.ne.s32.totalorder %s173, %s174
      %p188 = scmp.eq.s32.totalorder %s30, 1
      %p189 = por %p187, %p188
      %p191 = scmp.ne.s32.totalorder %s174, %s190
      %p192 = scmp.eq.s32.totalorder %s30, 0
      %p193 = por %p191, %p192
      %s194 = ssub.s32 %s24, %s31
      %p195 = scmp.eq.s32.totalorder %s194, 0
      %s197 = sadd.s32 %s196, 1
      %s198 = scalar_select %p195, %s196, %s197
      %p201 = pneg %p195
      %p202 = scmp.eq.s32.totalorder %s24, 1
      %p203 = por %p201, %p202
      %p204 = scmp.ne.s32.totalorder %s196, %s199
      %p205 = scmp.eq.s32.totalorder %s24, 0
      %p206 = por %p204, %p205
      %p207 = scmp.ne.s32.totalorder %s196, %s199
      %p208 = scmp.eq.s32.totalorder %s29, 1
      %p209 = por %p207, %p208
      %p210 = scmp.ne.s32.totalorder %s199, %s200
      %p211 = scmp.eq.s32.totalorder %s29, 0
      %p212 = por %p210, %p211
      %p213 = scmp.ne.s32.totalorder %s199, %s200
      %p214 = scmp.eq.s32.totalorder %s30, 1
      %p215 = por %p213, %p214
      %p217 = scmp.ne.s32.totalorder %s200, %s216
      %p218 = scmp.eq.s32.totalorder %s30, 0
      %p219 = por %p217, %p218
      %p220 = scmp.le.s32.totalorder 1, %s24
      %p221 = scmp.lt.s32.totalorder %s24, 3
      %p222 = pnand %p220, %p221
      %p223 = pneg %p222
      // Predicated region
      $region9: #{tpu_custom_call.1} parent=5 // pred_check
        _
      $region10: #{tpu_custom_call.1} parent=5 // pred_check_branch
        %225 = sbr.rel (%p222) target = $region12
      $region11: #{tpu_custom_call.1} parent=5 // pred_region
        %s226 = ssub.s32 %s24, 1
        // Predicated region
        $region13: #{tpu_custom_call.1} parent=11 // pred_check
          %p227 = pneg %p97
        $region14: #{tpu_custom_call.1} parent=11 // pred_check_branch
          %229 = sbr.rel (%p227) target = $region16
        $region15: #{tpu_custom_call.1} parent=11 // pred_region
          %s231 = ssub.s32 256, 256
          %232 = vsyncadd [#allocation6], %s231
          %s233 = sshll.u32 [#allocation7], 4
          %s234 = int_to_ptr.vmem [resolvable:$true] %s233
          %239 = dma.hbm_to_vmem [thread:$0]  %s2, 256, %s234, [#allocation6], 64, 64, 4
        $region16: #{tpu_custom_call.1} parent=11 // pred_fallthru
          _
        // Predicated region
        $region17: #{tpu_custom_call.1} parent=11 // pred_check
          %p240 = pneg %p118
        $region18: #{tpu_custom_call.1} parent=11 // pred_check_branch
          %242 = sbr.rel (%p240) target = $region20
        $region19: #{tpu_custom_call.1} parent=11 // pred_region
          %s244 = ssub.s32 256, 256
          %245 = vsyncadd [#allocation9], %s244
          %s246 = sshll.u32 [#allocation8], 4
          %s247 = int_to_ptr.vmem [resolvable:$true] %s246
          %252 = dma.hbm_to_vmem [thread:$0]  %s3, 256, %s247, [#allocation9], 64, 64, 4
        $region20: #{tpu_custom_call.1} parent=11 // pred_fallthru
          _
        // Predicated region
        $region21: #{tpu_custom_call.1} parent=11 // pred_check
          %p253 = pneg %p139
        $region22: #{tpu_custom_call.1} parent=11 // pred_check_branch
          %255 = sbr.rel (%p253) target = $region24
        $region23: #{tpu_custom_call.1} parent=11 // pred_region
          _
        $region24: #{tpu_custom_call.1} parent=11 // pred_fallthru
          _
        // Predicated region
        $region25: #{tpu_custom_call.1} parent=11 // pred_check
          %p256 = pneg %p160
        $region26: #{tpu_custom_call.1} parent=11 // pred_check_branch
          %258 = sbr.rel (%p256) target = $region28
        $region27: #{tpu_custom_call.1} parent=11 // pred_region
          _
        $region28: #{tpu_custom_call.1} parent=11 // pred_fallthru
          _
      $region12: #{tpu_custom_call.1} parent=5 // pred_fallthru
        _
      %p259 = scmp.lt.s32.totalorder %s24, 2
      // Predicated region
      $region29: #{tpu_custom_call.1} parent=5 // pred_check
        %p260 = pneg %p259
      $region30: #{tpu_custom_call.1} parent=5 // pred_check_branch
        %262 = sbr.rel (%p260) target = $region32
      $region31: #{tpu_custom_call.1} parent=5 // pred_region
        // Predicated region
        $region33: #{tpu_custom_call.1} parent=31 // pred_check
          %p263 = pneg %p44
        $region34: #{tpu_custom_call.1} parent=31 // pred_check_branch
          %265 = sbr.rel (%p263) target = $region36
        $region35: #{tpu_custom_call.1} parent=31 // pred_region
          %s266 = sand.u32 %s34, 1
          %s267 = scalar_lea.sflag [#allocation3], %s266
          %s268 = sand.u32 %s34, 1
          %s269 = smul.addr %s268, 8
          %s270 = scalar_lea.vmem [#allocation2], %s269
          %s272 = ssub.s32 128, 128
          %273 = vsyncadd %s267, %s272
          %s274 = smul.addr %s24, 128
          %s275 = scalar_lea.hbm %s0, %s274
          %s277 = sshll.u32 %s270, 4
          %s278 = int_to_ptr.vmem [resolvable:$true] %s277
          %280 = dma.hbm_to_vmem [thread:$0]  %s275, 128, %s278, %s267
        $region36: #{tpu_custom_call.1} parent=31 // pred_fallthru
          _
        // Predicated region
        $region37: #{tpu_custom_call.1} parent=31 // pred_check
          %p281 = pneg %p70
        $region38: #{tpu_custom_call.1} parent=31 // pred_check_branch
          %283 = sbr.rel (%p281) target = $region40
        $region39: #{tpu_custom_call.1} parent=31 // pred_region
          %s284 = sand.u32 %s24, 1
          %s285 = scalar_lea.sflag [#allocation6], %s284
          %s286 = sand.u32 %s60, 1
          %s287 = smul.addr %s286, 32
          %s288 = scalar_lea.vmem [#allocation5], %s287
          %s289 = smul.u32 8, %s24
          %s291 = ssub.s32 512, 512
          %292 = vsyncadd %s285, %s291
          %s293 = smul.addr %s289, 64
          %s294 = scalar_lea.hbm %s1, %s293
          %s295 = sshll.u32 %s288, 4
          %s296 = int_to_ptr.vmem [resolvable:$true] %s295
          %301 = dma.hbm_to_vmem [thread:$0]  %s294, 512, %s296, %s285, 64, 64, 4
        $region40: #{tpu_custom_call.1} parent=31 // pred_fallthru
          _
      $region32: #{tpu_custom_call.1} parent=5 // pred_fallthru
        _
      %p302 = scmp.le.s32.totalorder 1, %s24
      %p303 = scmp.lt.s32.totalorder %s24, 3
      %p304 = pnand %p302, %p303
      %p305 = pneg %p304
      // Predicated region
      $region41: #{tpu_custom_call.1} parent=5 // pred_check
        _
      $region42: #{tpu_custom_call.1} parent=5 // pred_check_branch
        %307 = sbr.rel (%p304) target = $region44
      $region43: #{tpu_custom_call.1} parent=5 // pred_region
        %s308 = ssub.s32 %s24, 1
        %s309 = sand.u32 %s37, 1
        %s310 = scalar_lea.sflag [#allocation3], %s309
        %s311 = sand.u32 %s37, 1
        %s312 = smul.addr %s311, 8
        %s313 = scalar_lea.vmem [#allocation2], %s312
        // Predicated region
        $region45: #{tpu_custom_call.1} parent=43 // pred_check
          %p314 = pneg %p50
        $region46: #{tpu_custom_call.1} parent=43 // pred_check_branch
          %316 = sbr.rel (%p314) target = $region48
        $region47: #{tpu_custom_call.1} parent=43 // pred_region
          %317 = dma.done %s310, 128
        $region48: #{tpu_custom_call.1} parent=43 // pred_fallthru
          _
        %s318 = sand.u32 %s29, 1
        %s319 = scalar_lea.sflag [#allocation6], %s318
        %s320 = sand.u32 %s63, 1
        %s321 = smul.addr %s320, 32
        %s322 = scalar_lea.vmem [#allocation5], %s321
        // Predicated region
        $region49: #{tpu_custom_call.1} parent=43 // pred_check
          %p323 = pneg %p76
        $region50: #{tpu_custom_call.1} parent=43 // pred_check_branch
          %325 = sbr.rel (%p323) target = $region52
        $region51: #{tpu_custom_call.1} parent=43 // pred_region
          %326 = dma.done %s319, 512
        $region52: #{tpu_custom_call.1} parent=43 // pred_fallthru
          _
        // Predicated region
        $region53: #{tpu_custom_call.1} parent=43 // pred_check
          %p327 = pneg %p97
        $region54: #{tpu_custom_call.1} parent=43 // pred_check_branch
          %329 = sbr.rel (%p327) target = $region56
        $region55: #{tpu_custom_call.1} parent=43 // pred_region
          %330 = dma.done [#allocation6], 256
        $region56: #{tpu_custom_call.1} parent=43 // pred_fallthru
          _
        // Predicated region
        $region57: #{tpu_custom_call.1} parent=43 // pred_check
          %p331 = pneg %p118
        $region58: #{tpu_custom_call.1} parent=43 // pred_check_branch
          %333 = sbr.rel (%p331) target = $region60
        $region59: #{tpu_custom_call.1} parent=43 // pred_region
          %334 = dma.done [#allocation9], 256
        $region60: #{tpu_custom_call.1} parent=43 // pred_fallthru
          _
        %s335 = sand.u32 %s37, 1
        %s336 = scalar_lea.sflag [#allocation3], %s335
        %s337 = sand.u32 %s37, 1
        %s338 = smul.addr %s337, 8
        %s339 = scalar_lea.vmem [#allocation2], %s338
        %p340 = pneg %p50
        %p341 = pneg %p47
        %s342 = sand.u32 %s29, 1
        %s343 = scalar_lea.sflag [#allocation6], %s342
        %s344 = sand.u32 %s63, 1
        %s345 = smul.addr %s344, 32
        %s346 = scalar_lea.vmem [#allocation5], %s345
        %p347 = pneg %p76
        %p348 = pneg %p73
        %p349 = pneg %p97
        %p350 = pneg %p94
        %p351 = pneg %p118
        %p352 = pneg %p115
        %p353 = pneg %p139
        %p354 = pneg %p136
        %p355 = pneg %p160
        %p356 = pneg %p157
        %p357 = pneg %p186
        %p358 = pneg %p183
        %s359 = sand.u32 %s173, 1
        %s360 = scalar_lea.sflag [#allocation4], %s359
        %s361 = sand.u32 %s173, 1
        %s362 = smul.addr %s361, 8
        %s363 = scalar_lea.vmem [#allocation10], %s362
        %p364 = pneg %p212
        %p365 = pneg %p209
        %p366 = scmp.lt.s32.totalorder %s29, 1
        %s367 = scalar_select %p366, %s29, 1
        %s368 = smul.addr %s367, 8
        %s369 = scalar_lea.vmem %s7, %s368
        %s370 = smul.u32 8, %s29
        %p371 = scmp.lt.s32.totalorder %s29, 1
        %s372 = scalar_select %p371, %s29, 1
        %s373 = smul.addr %s372, 8
        %s374 = scalar_lea.vmem %s7, %s373
        %v376 = vld [vmem:[%s322] sm:$0xf]
        %v377 = vld [vmem:[%s322 + $0x4] sm:$0xf]
        %v378 = vld [vmem:[%s322 + $0x8] sm:$0xf]
        %v379 = vld [vmem:[%s322 + $0xc] sm:$0xf]
        %v380 = vld [vmem:[%s322 + $0x10] sm:$0xf]
        %v381 = vld [vmem:[%s322 + $0x14] sm:$0xf]
        %v382 = vld [vmem:[%s322 + $0x18] sm:$0xf]
        %v383 = vld [vmem:[%s322 + $0x1c] sm:$0xf]
        %v384 = vld [vmem:[%s313] sm:$0xff]
        %v385 = vpack.c.bf16 %v384, %v384
        %v386 = vld [vmem:[#allocation7] sm:$0xf]
        %v387 = vld [vmem:[#allocation7 + $0x4] sm:$0xf]
        %v388 = vld [vmem:[#allocation7 + $0x8] sm:$0xf]
        %v389 = vld [vmem:[#allocation7 + $0xc] sm:$0xf]
        %v390 = vld [vmem:[%s4] sm:$0x1]
        %v392 = vlaneseq
        %v393 = vshrl.u32 %v392, 7
        %v394 = vsub.s32 0, %v393
        %v395 = vrot.slane %v390, %v394
        %v401 = vunpack.c.l.b16 %v386
        %v402 = vunpack.c.l.b16 %v387
        %v403 = vunpack.c.l.b16 %v388
        %v404 = vunpack.c.l.b16 %v389
        %v405 = vpack.c.b16 %v402, %v401
        %v406 = vpack.c.b16 %v404, %v403
        %vm409 = vcmask 261120
        %v411 = vsel %vm409, %v385, 0
        %413 = vmatprep.subr.bf16.mxu0 0
        %414 = vmatpush1.bf16.msra.mxu0 0
        %415 = vmatprep.subr.bf16.mxu0 0
        %416 = vmatpush1.bf16.msra.mxu0 0
        %417 = vmatprep.subr.bf16.mxu0 0
        %418 = vmatpush1.bf16.msra.mxu0 0
        %419 = vmatprep.subr.bf16.mxu0 0
        %420 = vmatpush1.bf16.msra.mxu0 0
        %421 = vmatprep.subr.bf16.mxu0 0
        %422 = vmatpush1.bf16.msra.mxu0 0
        %423 = vmatprep.subr.bf16.mxu0 0
        %424 = vmatpush1.bf16.msra.mxu0 0
        %425 = vmatprep.subr.bf16.mxu0 0
        %426 = vmatpush1.bf16.msra.mxu0 %v406
        %427 = vmatprep.subr.bf16.mxu0 0
        %428 = vmatpush1.bf16.msra.mxu0 %v405
        %429 = vmatprep.subr.bf16.mxu0 0
        %430 = vmatpush2.bf16.msra.mxu0 0
        %431 = vmatprep.subr.bf16.mxu0 0
        %432 = vmatpush2.bf16.msra.mxu0 0
        %433 = vmatprep.subr.bf16.mxu0 0
        %434 = vmatpush2.bf16.msra.mxu0 0
        %435 = vmatprep.subr.bf16.mxu0 0
        %436 = vmatpush2.bf16.msra.mxu0 0
        %437 = vmatprep.subr.bf16.mxu0 0
        %438 = vmatpush2.bf16.msra.mxu0 0
        %439 = vmatprep.subr.bf16.mxu0 0
        %440 = vmatpush2.bf16.msra.mxu0 0
        %441 = vmatprep.subr.bf16.mxu0 0
        %442 = vmatpush2.bf16.msra.mxu0 0
        %443 = vmatprep.subr.bf16.mxu0 0
        %444 = vmatpush2.bf16.msra.mxu0 0
        %445 = vmatprep.mubr.bf16.mxu0 0
        %446 = vmatmul.mubr.bf16.gmra.mxu0 %v411
        %v447 = vpop.f32.mrf.mxu0
        %v448 = vadd.f32 %v395, %v447
        %v449 = vpop.f32.mrf.mxu0
        %v450 = vpop.f32.mrf.mxu0
        %v451 = vpop.f32.mrf.mxu0
        %452 = vdwg.mxu0
        %v453 = vld [vmem:[#allocation8] sm:$0xf]
        %v454 = vld [vmem:[#allocation8 + $0x4] sm:$0xf]
        %v455 = vld [vmem:[#allocation8 + $0x8] sm:$0xf]
        %v456 = vld [vmem:[#allocation8 + $0xc] sm:$0xf]
        %v465 = vunpack.c.l.b16 %v376
        %v466 = vunpack.c.l.b16 %v377
        %v467 = vunpack.c.l.b16 %v378
        %v468 = vunpack.c.l.b16 %v379
        %v469 = vunpack.c.l.b16 %v380
        %v470 = vunpack.c.l.b16 %v381
        %v471 = vunpack.c.l.b16 %v382
        %v472 = vunpack.c.l.b16 %v383
        %v473 = vpack.c.b16 %v466, %v465
        %v474 = vpack.c.b16 %v468, %v467
        %v475 = vpack.c.b16 %v470, %v469
        %v476 = vpack.c.b16 %v472, %v471
        %v481 = vunpack.c.l.b16 %v453
        %v482 = vunpack.c.l.b16 %v454
        %v483 = vunpack.c.l.b16 %v455
        %v484 = vunpack.c.l.b16 %v456
        %v485 = vpack.c.b16 %v482, %v481
        %v486 = vpack.c.b16 %v484, %v483
        %v490 = vsel %vm409, %v473, 0
        %v493 = vsel %vm409, %v474, 0
        %v496 = vsel %vm409, %v475, 0
        %v499 = vsel %vm409, %v476, 0
        %501 = vmatprep.subr.bf16.mxu0 0
        %502 = vmatpush1.bf16.msra.mxu0 0
        %503 = vmatprep.subr.bf16.mxu0 0
        %504 = vmatpush1.bf16.msra.mxu0 0
        %505 = vmatprep.subr.bf16.mxu0 0
        %506 = vmatpush1.bf16.msra.mxu0 0
        %507 = vmatprep.subr.bf16.mxu0 0
        %508 = vmatpush1.bf16.msra.mxu0 0
        %509 = vmatprep.subr.bf16.mxu0 0
        %510 = vmatpush1.bf16.msra.mxu0 0
        %511 = vmatprep.subr.bf16.mxu0 0
        %512 = vmatpush1.bf16.msra.mxu0 0
        %513 = vmatprep.subr.bf16.mxu0 0
        %514 = vmatpush1.bf16.msra.mxu0 %v486
        %515 = vmatprep.subr.bf16.mxu0 0
        %516 = vmatpush1.bf16.msra.mxu0 %v485
        %517 = vmatprep.subr.bf16.mxu0 0
        %518 = vmatpush2.bf16.msra.mxu0 0
        %519 = vmatprep.subr.bf16.mxu0 0
        %520 = vmatpush2.bf16.msra.mxu0 0
        %521 = vmatprep.subr.bf16.mxu0 0
        %522 = vmatpush2.bf16.msra.mxu0 0
        %523 = vmatprep.subr.bf16.mxu0 0
        %524 = vmatpush2.bf16.msra.mxu0 0
        %525 = vmatprep.subr.bf16.mxu0 0
        %526 = vmatpush2.bf16.msra.mxu0 0
        %527 = vmatprep.subr.bf16.mxu0 0
        %528 = vmatpush2.bf16.msra.mxu0 0
        %529 = vmatprep.subr.bf16.mxu0 0
        %530 = vmatpush2.bf16.msra.mxu0 0
        %531 = vmatprep.subr.bf16.mxu0 0
        %532 = vmatpush2.bf16.msra.mxu0 0
        %533 = vmatprep.mubr.bf16.mxu0 0
        %534 = vmatmul.mubr.bf16.gmra.mxu0 %v490
        %v535 = vpop.f32.mrf.mxu0
        %v536 = vadd.f32 0.0, %v535
        %v537 = vpop.f32.mrf.mxu0
        %v538 = vpop.f32.mrf.mxu0
        %v539 = vadd.f32 0.0, %v538
        %v540 = vpop.f32.mrf.mxu0
        %541 = vmatprep.mubr.bf16.mxu0 0
        %542 = vmatmul.mubr.bf16.gmra.mxu0 %v493
        %v543 = vpop.f32.mrf.mxu0
        %v544 = vadd.f32 0.0, %v543
        %v545 = vpop.f32.mrf.mxu0
        %v546 = vpop.f32.mrf.mxu0
        %v547 = vadd.f32 0.0, %v546
        %v548 = vpop.f32.mrf.mxu0
        %549 = vmatprep.mubr.bf16.mxu0 0
        %550 = vmatmul.mubr.bf16.gmra.mxu0 %v496
        %v551 = vpop.f32.mrf.mxu0
        %v552 = vadd.f32 0.0, %v551
        %v553 = vpop.f32.mrf.mxu0
        %v554 = vpop.f32.mrf.mxu0
        %v555 = vadd.f32 0.0, %v554
        %v556 = vpop.f32.mrf.mxu0
        %557 = vmatprep.mubr.bf16.mxu0 0
        %558 = vmatmul.mubr.bf16.gmra.mxu0 %v499
        %v559 = vpop.f32.mrf.mxu0
        %v560 = vadd.f32 0.0, %v559
        %v561 = vpop.f32.mrf.mxu0
        %v562 = vpop.f32.mrf.mxu0
        %v563 = vadd.f32 0.0, %v562
        %v564 = vpop.f32.mrf.mxu0
        %565 = vdwg.mxu0
        %v567 = vcombine.high %v448, %v448
        %v569 = vunpack.c.l.s4 1966171168
        %v570 = vunpack.c.0.s8 %v569
        %v571 = vlaneseq
        %v572 = vshrl.u32 %v571, 7
        %v573 = vsub.s32 %v570, %v572
        %v574 = vrot.slane %v448, %v573
        %v576 = vunpack.c.l.s4 1966171168
        %v577 = vunpack.c.0.s8 %v576
        %v578 = vlaneseq
        %v579 = vshrl.u32 %v578, 7
        %v580 = vsub.s32 %v577, %v579
        %v581 = vrot.slane %v567, %v580
        %v582 = vcombine.high %v574, %v574
        %v583 = vcombine.high %v581, %v581
        %v585 = vunpack.c.l.s4 1966171168
        %v586 = vunpack.c.0.s8 %v585
        %v587 = vlaneseq
        %v588 = vshrl.u32 %v587, 7
        %v589 = vsub.s32 %v586, %v588
        %v590 = vrot.slane %v574, %v589
        %v592 = vunpack.c.l.s4 1966171168
        %v593 = vunpack.c.0.s8 %v592
        %v594 = vlaneseq
        %v595 = vshrl.u32 %v594, 7
        %v596 = vsub.s32 %v593, %v595
        %v597 = vrot.slane %v581, %v596
        %v599 = vunpack.c.l.s4 1966171168
        %v600 = vunpack.c.0.s8 %v599
        %v601 = vlaneseq
        %v602 = vshrl.u32 %v601, 7
        %v603 = vsub.s32 %v600, %v602
        %v604 = vrot.slane %v582, %v603
        %v606 = vunpack.c.l.s4 1966171168
        %v607 = vunpack.c.0.s8 %v606
        %v608 = vlaneseq
        %v609 = vshrl.u32 %v608, 7
        %v610 = vsub.s32 %v607, %v609
        %v611 = vrot.slane %v583, %v610
        %v612 = vcombine.high %v590, %v590
        %v613 = vcombine.high %v597, %v597
        %v614 = vcombine.high %v604, %v604
        %v615 = vcombine.high %v611, %v611
        %v616 = vlaneseq
        %v617 = vshrl.u32 %v616, 7
        %v618 = vsub.s32 0, %v617
        %v619 = vrot.slane %v590, %v618
        %v620 = vlaneseq
        %v621 = vshrl.u32 %v620, 7
        %v622 = vsub.s32 0, %v621
        %v623 = vrot.slane %v604, %v622
        %v624 = vlaneseq
        %v625 = vshrl.u32 %v624, 7
        %v626 = vsub.s32 0, %v625
        %v627 = vrot.slane %v612, %v626
        %v628 = vlaneseq
        %v629 = vshrl.u32 %v628, 7
        %v630 = vsub.s32 0, %v629
        %v631 = vrot.slane %v614, %v630
        %v632 = vlaneseq
        %v633 = vshrl.u32 %v632, 7
        %v634 = vsub.s32 0, %v633
        %v635 = vrot.slane %v597, %v634
        %v636 = vlaneseq
        %v637 = vshrl.u32 %v636, 7
        %v638 = vsub.s32 0, %v637
        %v639 = vrot.slane %v611, %v638
        %v640 = vlaneseq
        %v641 = vshrl.u32 %v640, 7
        %v642 = vsub.s32 0, %v641
        %v643 = vrot.slane %v613, %v642
        %v644 = vlaneseq
        %v645 = vshrl.u32 %v644, 7
        %v646 = vsub.s32 0, %v645
        %v647 = vrot.slane %v615, %v646
        %v656 = vadd.f32 %v619, %v536
        %v657 = vadd.f32 %v623, %v539
        %v658 = vadd.f32 %v627, %v544
        %v659 = vadd.f32 %v631, %v547
        %v660 = vadd.f32 %v635, %v552
        %v661 = vadd.f32 %v639, %v555
        %v662 = vadd.f32 %v643, %v560
        %v663 = vadd.f32 %v647, %v563
        %v664 = vtanh.pop %v656
        %v665 = vtanh.pop %v657
        %v666 = vtanh.pop %v658
        %v667 = vtanh.pop %v659
        %v668 = vtanh.pop %v660
        %v669 = vtanh.pop %v661
        %v670 = vtanh.pop %v662
        %v671 = vtanh.pop %v663
        %v672 = vld [vmem:[%s5] sm:$0x1]
        %v674 = vlaneseq
        %v675 = vshrl.u32 %v674, 7
        %v676 = vsub.s32 0, %v675
        %v677 = vrot.slane %v672, %v676
        %v679 = vmul.f32 %v664, %v677
        %v680 = vmul.f32 %v665, %v677
        %v681 = vmul.f32 %v666, %v677
        %v682 = vmul.f32 %v667, %v677
        %v683 = vmul.f32 %v668, %v677
        %v684 = vmul.f32 %v669, %v677
        %v685 = vmul.f32 %v670, %v677
        %v686 = vmul.f32 %v671, %v677
        %v687 = vsel %vm409, %v679, 0.0
        %688 = vadd.xlane.f32.xlu0 %v687
        %v689 = vpop.xlane.xlu0 %688
        %v690 = vsel %vm409, %v680, 0.0
        %691 = vadd.xlane.f32.xlu0 %v690
        %v692 = vpop.xlane.xlu0 %691
        %v693 = vsel %vm409, %v681, 0.0
        %694 = vadd.xlane.f32.xlu0 %v693
        %v695 = vpop.xlane.xlu0 %694
        %v696 = vsel %vm409, %v682, 0.0
        %697 = vadd.xlane.f32.xlu0 %v696
        %v698 = vpop.xlane.xlu0 %697
        %v699 = vsel %vm409, %v683, 0.0
        %700 = vadd.xlane.f32.xlu0 %v699
        %v701 = vpop.xlane.xlu0 %700
        %v702 = vsel %vm409, %v684, 0.0
        %703 = vadd.xlane.f32.xlu0 %v702
        %v704 = vpop.xlane.xlu0 %703
        %v705 = vsel %vm409, %v685, 0.0
        %706 = vadd.xlane.f32.xlu0 %v705
        %v707 = vpop.xlane.xlu0 %706
        %v708 = vsel %vm409, %v686, 0.0
        %709 = vadd.xlane.f32.xlu0 %v708
        %v710 = vpop.xlane.xlu0 %709
        %v719 = vlaneseq
        %v720 = vand.u32 %v719, 127
        %v721 = vlaneseq
        %v722 = vshrl.u32 %v721, 7
        %v723 = vsub.s32 %v720, %v722
        %v724 = vrot.slane %v689, %v723
        %v725 = vlaneseq
        %v726 = vshrl.u32 %v725, 7
        %v727 = vsub.s32 %v720, %v726
        %v728 = vrot.slane %v692, %v727
        %v729 = vlaneseq
        %v730 = vshrl.u32 %v729, 7
        %v731 = vsub.s32 %v720, %v730
        %v732 = vrot.slane %v695, %v731
        %v733 = vlaneseq
        %v734 = vshrl.u32 %v733, 7
        %v735 = vsub.s32 %v720, %v734
        %v736 = vrot.slane %v698, %v735
        %v737 = vlaneseq
        %v738 = vshrl.u32 %v737, 7
        %v739 = vsub.s32 %v720, %v738
        %v740 = vrot.slane %v701, %v739
        %v741 = vlaneseq
        %v742 = vshrl.u32 %v741, 7
        %v743 = vsub.s32 %v720, %v742
        %v744 = vrot.slane %v704, %v743
        %v745 = vlaneseq
        %v746 = vshrl.u32 %v745, 7
        %v747 = vsub.s32 %v720, %v746
        %v748 = vrot.slane %v707, %v747
        %v749 = vlaneseq
        %v750 = vshrl.u32 %v749, 7
        %v751 = vsub.s32 %v720, %v750
        %v752 = vrot.slane %v710, %v751
        %vm753 = vcmask 1041409
        %v754 = vsel %vm753, %v728, %v724
        %vm755 = vcmask 1042434
        %v756 = vsel %vm755, %v732, %v754
        %vm757 = vcmask 1043459
        %v758 = vsel %vm757, %v736, %v756
        %vm759 = vcmask 1044484
        %v760 = vsel %vm759, %v740, %v758
        %vm761 = vcmask 1045509
        %v762 = vsel %vm761, %v744, %v760
        %vm763 = vcmask 1046534
        %v764 = vsel %vm763, %v748, %v762
        %vm765 = vcmask 1047559
        %v766 = vsel %vm765, %v752, %v764
        %vm768 = vcmask 64512
        %v769 = vsel %vm768, %v766, -inf
        %770 = vmax.xlane.f32.xlu0 %v769
        %v771 = vpop.xlane.xlu0 %770
        %v773 = vlaneseq
        %v774 = vshrl.u32 %v773, 7
        %v775 = vsub.s32 0, %v774
        %v776 = vrot.slane %v771, %v775
        %v777 = vlaneseq
        %v778 = vshrl.u32 %v777, 7
        %v779 = vsub.s32 1, %v778
        %v780 = vrot.slane %v771, %v779
        %v781 = vlaneseq
        %v782 = vshrl.u32 %v781, 7
        %v783 = vsub.s32 2, %v782
        %v784 = vrot.slane %v771, %v783
        %v785 = vlaneseq
        %v786 = vshrl.u32 %v785, 7
        %v787 = vsub.s32 3, %v786
        %v788 = vrot.slane %v771, %v787
        %v789 = vlaneseq
        %v790 = vshrl.u32 %v789, 7
        %v791 = vsub.s32 4, %v790
        %v792 = vrot.slane %v771, %v791
        %v793 = vlaneseq
        %v794 = vshrl.u32 %v793, 7
        %v795 = vsub.s32 5, %v794
        %v796 = vrot.slane %v771, %v795
        %v797 = vlaneseq
        %v798 = vshrl.u32 %v797, 7
        %v799 = vsub.s32 6, %v798
        %v800 = vrot.slane %v771, %v799
        %v801 = vlaneseq
        %v802 = vshrl.u32 %v801, 7
        %v803 = vsub.s32 7, %v802
        %v804 = vrot.slane %v771, %v803
        %v813 = vsub.f32 %v689, %v776
        %v814 = vsub.f32 %v692, %v780
        %v815 = vsub.f32 %v695, %v784
        %v816 = vsub.f32 %v698, %v788
        %v817 = vsub.f32 %v701, %v792
        %v818 = vsub.f32 %v704, %v796
        %v819 = vsub.f32 %v707, %v800
        %v820 = vsub.f32 %v710, %v804
        %v821 = vmul.f32 %v813, 1.442695
        %v822 = vpow.pop %v821
        %v823 = vmul.f32 %v814, 1.442695
        %v824 = vpow.pop %v823
        %v825 = vmul.f32 %v815, 1.442695
        %v826 = vpow.pop %v825
        %v827 = vmul.f32 %v816, 1.442695
        %v828 = vpow.pop %v827
        %v829 = vmul.f32 %v817, 1.442695
        %v830 = vpow.pop %v829
        %v831 = vmul.f32 %v818, 1.442695
        %v832 = vpow.pop %v831
        %v833 = vmul.f32 %v819, 1.442695
        %v834 = vpow.pop %v833
        %v835 = vmul.f32 %v820, 1.442695
        %v836 = vpow.pop %v835
        %845 = vset.pattern.permute.xlu0 0
        %846 = vperm.xlu0 %845, %v822
        %v847 = vpop.permute.xlu0 %846
        %848 = vset.pattern.permute.xlu0 0
        %849 = vperm.xlu0 %848, %v824
        %v850 = vpop.permute.xlu0 %849
        %851 = vset.pattern.permute.xlu0 0
        %852 = vperm.xlu0 %851, %v826
        %v853 = vpop.permute.xlu0 %852
        %854 = vset.pattern.permute.xlu0 0
        %855 = vperm.xlu0 %854, %v828
        %v856 = vpop.permute.xlu0 %855
        %857 = vset.pattern.permute.xlu0 0
        %858 = vperm.xlu0 %857, %v830
        %v859 = vpop.permute.xlu0 %858
        %860 = vset.pattern.permute.xlu0 0
        %861 = vperm.xlu0 %860, %v832
        %v862 = vpop.permute.xlu0 %861
        %863 = vset.pattern.permute.xlu0 0
        %864 = vperm.xlu0 %863, %v834
        %v865 = vpop.permute.xlu0 %864
        %866 = vset.pattern.permute.xlu0 0
        %867 = vperm.xlu0 %866, %v836
        %v868 = vpop.permute.xlu0 %867
        %v869 = vlaneseq
        %v870 = vshrl.u32 %v869, 7
        %v871 = vsub.s32 %v720, %v870
        %v872 = vrot.slane %v847, %v871
        %v873 = vlaneseq
        %v874 = vshrl.u32 %v873, 7
        %v875 = vsub.s32 %v720, %v874
        %v876 = vrot.slane %v850, %v875
        %v877 = vlaneseq
        %v878 = vshrl.u32 %v877, 7
        %v879 = vsub.s32 %v720, %v878
        %v880 = vrot.slane %v853, %v879
        %v881 = vlaneseq
        %v882 = vshrl.u32 %v881, 7
        %v883 = vsub.s32 %v720, %v882
        %v884 = vrot.slane %v856, %v883
        %v885 = vlaneseq
        %v886 = vshrl.u32 %v885, 7
        %v887 = vsub.s32 %v720, %v886
        %v888 = vrot.slane %v859, %v887
        %v889 = vlaneseq
        %v890 = vshrl.u32 %v889, 7
        %v891 = vsub.s32 %v720, %v890
        %v892 = vrot.slane %v862, %v891
        %v893 = vlaneseq
        %v894 = vshrl.u32 %v893, 7
        %v895 = vsub.s32 %v720, %v894
        %v896 = vrot.slane %v865, %v895
        %v897 = vlaneseq
        %v898 = vshrl.u32 %v897, 7
        %v899 = vsub.s32 %v720, %v898
        %v900 = vrot.slane %v868, %v899
        %v901 = vsel %vm753, %v876, %v872
        %v902 = vsel %vm755, %v880, %v901
        %v903 = vsel %vm757, %v884, %v902
        %v904 = vsel %vm759, %v888, %v903
        %v905 = vsel %vm761, %v892, %v904
        %v906 = vsel %vm763, %v896, %v905
        %v907 = vsel %vm765, %v900, %v906
        %v909 = vsel %vm768, %v907, 0.0
        %910 = vadd.xlane.f32.xlu0 %v909
        %v911 = vpop.xlane.xlu0 %910
        %v912 = vrcp.pop %v911
        %v914 = vlaneseq
        %v915 = vshrl.u32 %v914, 7
        %v916 = vsub.s32 0, %v915
        %v917 = vrot.slane %v912, %v916
        %v918 = vlaneseq
        %v919 = vshrl.u32 %v918, 7
        %v920 = vsub.s32 1, %v919
        %v921 = vrot.slane %v912, %v920
        %v922 = vlaneseq
        %v923 = vshrl.u32 %v922, 7
        %v924 = vsub.s32 2, %v923
        %v925 = vrot.slane %v912, %v924
        %v926 = vlaneseq
        %v927 = vshrl.u32 %v926, 7
        %v928 = vsub.s32 3, %v927
        %v929 = vrot.slane %v912, %v928
        %v930 = vlaneseq
        %v931 = vshrl.u32 %v930, 7
        %v932 = vsub.s32 4, %v931
        %v933 = vrot.slane %v912, %v932
        %v934 = vlaneseq
        %v935 = vshrl.u32 %v934, 7
        %v936 = vsub.s32 5, %v935
        %v937 = vrot.slane %v912, %v936
        %v938 = vlaneseq
        %v939 = vshrl.u32 %v938, 7
        %v940 = vsub.s32 6, %v939
        %v941 = vrot.slane %v912, %v940
        %v942 = vlaneseq
        %v943 = vshrl.u32 %v942, 7
        %v944 = vsub.s32 7, %v943
        %v945 = vrot.slane %v912, %v944
        %v954 = vmul.f32 %v822, %v917
        %v955 = vmul.f32 %v824, %v921
        %v956 = vmul.f32 %v826, %v925
        %v957 = vmul.f32 %v828, %v929
        %v958 = vmul.f32 %v830, %v933
        %v959 = vmul.f32 %v832, %v937
        %v960 = vmul.f32 %v834, %v941
        %v961 = vmul.f32 %v836, %v945
        %v962 = vunpack.c.l.bf16 %v376
        %v963 = vunpack.c.l.bf16 %v377
        %v964 = vunpack.c.l.bf16 %v378
        %v965 = vunpack.c.l.bf16 %v379
        %v966 = vunpack.c.l.bf16 %v380
        %v967 = vunpack.c.l.bf16 %v381
        %v968 = vunpack.c.l.bf16 %v382
        %v969 = vunpack.c.l.bf16 %v383
        %971 = vset.pattern.permute.xlu0 0
        %972 = vperm.xlu0 %971, %v954
        %v973 = vpop.permute.xlu0 %972
        %976 = vset.pattern.permute.xlu0 0
        %977 = vperm.xlu0 %976, %v955
        %v978 = vpop.permute.xlu0 %977
        %981 = vset.pattern.permute.xlu0 0
        %982 = vperm.xlu0 %981, %v956
        %v983 = vpop.permute.xlu0 %982
        %986 = vset.pattern.permute.xlu0 0
        %987 = vperm.xlu0 %986, %v957
        %v988 = vpop.permute.xlu0 %987
        %991 = vset.pattern.permute.xlu0 0
        %992 = vperm.xlu0 %991, %v958
        %v993 = vpop.permute.xlu0 %992
        %996 = vset.pattern.permute.xlu0 0
        %997 = vperm.xlu0 %996, %v959
        %v998 = vpop.permute.xlu0 %997
        %1001 = vset.pattern.permute.xlu0 0
        %1002 = vperm.xlu0 %1001, %v960
        %v1003 = vpop.permute.xlu0 %1002
        %1006 = vset.pattern.permute.xlu0 0
        %1007 = vperm.xlu0 %1006, %v961
        %v1008 = vpop.permute.xlu0 %1007
        %v1010 = vmul.f32 %v973, %v962
        %v1011 = vmul.f32 %v978, %v963
        %v1012 = vmul.f32 %v983, %v964
        %v1013 = vmul.f32 %v988, %v965
        %v1014 = vmul.f32 %v993, %v966
        %v1015 = vmul.f32 %v998, %v967
        %v1016 = vmul.f32 %v1003, %v968
        %v1017 = vmul.f32 %v1008, %v969
        %v1018 = vsel %vm409, %v1010, 0.0
        %v1019 = vrot.slane %v1018, 4
        %v1020 = vadd.f32 %v1018, %v1019
        %v1021 = vrot.slane %v1020, 2
        %v1022 = vadd.f32 %v1020, %v1021
        %v1023 = vrot.slane %v1022, 1
        %v1024 = vadd.f32 %v1022, %v1023
        %v1025 = vsel %vm409, %v1011, 0.0
        %v1026 = vrot.slane %v1025, 4
        %v1027 = vadd.f32 %v1025, %v1026
        %v1028 = vrot.slane %v1027, 2
        %v1029 = vadd.f32 %v1027, %v1028
        %v1030 = vrot.slane %v1029, 1
        %v1031 = vadd.f32 %v1029, %v1030
        %v1032 = vsel %vm409, %v1012, 0.0
        %v1033 = vrot.slane %v1032, 4
        %v1034 = vadd.f32 %v1032, %v1033
        %v1035 = vrot.slane %v1034, 2
        %v1036 = vadd.f32 %v1034, %v1035
        %v1037 = vrot.slane %v1036, 1
        %v1038 = vadd.f32 %v1036, %v1037
        %v1039 = vsel %vm409, %v1013, 0.0
        %v1040 = vrot.slane %v1039, 4
        %v1041 = vadd.f32 %v1039, %v1040
        %v1042 = vrot.slane %v1041, 2
        %v1043 = vadd.f32 %v1041, %v1042
        %v1044 = vrot.slane %v1043, 1
        %v1045 = vadd.f32 %v1043, %v1044
        %v1046 = vsel %vm409, %v1014, 0.0
        %v1047 = vrot.slane %v1046, 4
        %v1048 = vadd.f32 %v1046, %v1047
        %v1049 = vrot.slane %v1048, 2
        %v1050 = vadd.f32 %v1048, %v1049
        %v1051 = vrot.slane %v1050, 1
        %v1052 = vadd.f32 %v1050, %v1051
        %v1053 = vsel %vm409, %v1015, 0.0
        %v1054 = vrot.slane %v1053, 4
        %v1055 = vadd.f32 %v1053, %v1054
        %v1056 = vrot.slane %v1055, 2
        %v1057 = vadd.f32 %v1055, %v1056
        %v1058 = vrot.slane %v1057, 1
        %v1059 = vadd.f32 %v1057, %v1058
        %v1060 = vsel %vm409, %v1016, 0.0
        %v1061 = vrot.slane %v1060, 4
        %v1062 = vadd.f32 %v1060, %v1061
        %v1063 = vrot.slane %v1062, 2
        %v1064 = vadd.f32 %v1062, %v1063
        %v1065 = vrot.slane %v1064, 1
        %v1066 = vadd.f32 %v1064, %v1065
        %v1067 = vsel %vm409, %v1017, 0.0
        %v1068 = vrot.slane %v1067, 4
        %v1069 = vadd.f32 %v1067, %v1068
        %v1070 = vrot.slane %v1069, 2
        %v1071 = vadd.f32 %v1069, %v1070
        %v1072 = vrot.slane %v1071, 1
        %v1073 = vadd.f32 %v1071, %v1072
        %v1082 = vsel %vm753, %v1031, %v1024
        %v1083 = vsel %vm755, %v1038, %v1082
        %v1084 = vsel %vm757, %v1045, %v1083
        %v1085 = vsel %vm759, %v1052, %v1084
        %v1086 = vsel %vm761, %v1059, %v1085
        %v1087 = vsel %vm763, %v1066, %v1086
        %v1088 = vsel %vm765, %v1073, %v1087
        %1090 = vst.msk [vmem:[%s363] sm:$0xff] %vm409, %v1088
        %v1091 = vlaneseq
        %v1092 = vshrl.u32 %v1091, 7
        %v1093 = vsub.s32 %v720, %v1092
        %v1094 = vrot.slane %v973, %v1093
        %v1095 = vlaneseq
        %v1096 = vshrl.u32 %v1095, 7
        %v1097 = vsub.s32 %v720, %v1096
        %v1098 = vrot.slane %v978, %v1097
        %v1099 = vlaneseq
        %v1100 = vshrl.u32 %v1099, 7
        %v1101 = vsub.s32 %v720, %v1100
        %v1102 = vrot.slane %v983, %v1101
        %v1103 = vlaneseq
        %v1104 = vshrl.u32 %v1103, 7
        %v1105 = vsub.s32 %v720, %v1104
        %v1106 = vrot.slane %v988, %v1105
        %v1107 = vlaneseq
        %v1108 = vshrl.u32 %v1107, 7
        %v1109 = vsub.s32 %v720, %v1108
        %v1110 = vrot.slane %v993, %v1109
        %v1111 = vlaneseq
        %v1112 = vshrl.u32 %v1111, 7
        %v1113 = vsub.s32 %v720, %v1112
        %v1114 = vrot.slane %v998, %v1113
        %v1115 = vlaneseq
        %v1116 = vshrl.u32 %v1115, 7
        %v1117 = vsub.s32 %v720, %v1116
        %v1118 = vrot.slane %v1003, %v1117
        %v1119 = vlaneseq
        %v1120 = vshrl.u32 %v1119, 7
        %v1121 = vsub.s32 %v720, %v1120
        %v1122 = vrot.slane %v1008, %v1121
        %v1123 = vsel %vm753, %v1098, %v1094
        %v1124 = vsel %vm755, %v1102, %v1123
        %v1125 = vsel %vm757, %v1106, %v1124
        %v1126 = vsel %vm759, %v1110, %v1125
        %v1127 = vsel %vm761, %v1114, %v1126
        %v1128 = vsel %vm763, %v1118, %v1127
        %v1129 = vsel %vm765, %v1122, %v1128
        %1131 = vst.msk [vmem:[%s374] sm:$0xff] %vm768, %v1129
        %s1132 = sand.u32 %s173, 1
        %s1133 = scalar_lea.sflag [#allocation4], %s1132
        %s1134 = sand.u32 %s173, 1
        %s1135 = smul.addr %s1134, 8
        %s1136 = scalar_lea.vmem [#allocation10], %s1135
        %p1137 = scmp.lt.s32.totalorder %s29, 1
        %s1138 = scalar_select %p1137, %s29, 1
        %s1139 = smul.addr %s1138, 8
        %s1140 = scalar_lea.vmem %s7, %s1139
        // Predicated region
        $region61: #{tpu_custom_call.1} parent=43 // pred_check
          %p1141 = pneg %p183
        $region62: #{tpu_custom_call.1} parent=43 // pred_check_branch
          %1143 = sbr.rel (%p1141) target = $region64
        $region63: #{tpu_custom_call.1} parent=43 // pred_region
          %s1145 = ssub.s32 128, 128
          %1146 = vsyncadd %s1133, %s1145
          %s1147 = smul.addr %s29, 128
          %s1148 = scalar_lea.hbm %s6, %s1147
          %s1150 = sshll.u32 %s1136, 4
          %s1151 = int_to_ptr.vmem [resolvable:$true] %s1150
          %1153 = dma.vmem_to_hbm [thread:$0]  %s1151, 128, %s1148, %s1133
        $region64: #{tpu_custom_call.1} parent=43 // pred_fallthru
          _
        // Predicated region
        $region65: #{tpu_custom_call.1} parent=43 // pred_check
          %p1154 = pneg %p209
        $region66: #{tpu_custom_call.1} parent=43 // pred_check_branch
          %1156 = sbr.rel (%p1154) target = $region68
        $region67: #{tpu_custom_call.1} parent=43 // pred_region
          _
        $region68: #{tpu_custom_call.1} parent=43 // pred_fallthru
          _
      $region44: #{tpu_custom_call.1} parent=5 // pred_fallthru
        _
      %p1157 = scmp.le.s32.totalorder 2, %s24
      // Predicated region
      $region69: #{tpu_custom_call.1} parent=5 // pred_check
        %p1158 = pneg %p1157
      $region70: #{tpu_custom_call.1} parent=5 // pred_check_branch
        %1160 = sbr.rel (%p1158) target = $region72
      $region71: #{tpu_custom_call.1} parent=5 // pred_region
        %s1161 = ssub.s32 %s24, 2
        // Predicated region
        $region73: #{tpu_custom_call.1} parent=71 // pred_check
          %p1162 = pneg %p189
        $region74: #{tpu_custom_call.1} parent=71 // pred_check_branch
          %1164 = sbr.rel (%p1162) target = $region76
        $region75: #{tpu_custom_call.1} parent=71 // pred_region
          %s1165 = sand.u32 %s174, 1
          %s1166 = scalar_lea.sflag [#allocation4], %s1165
          %s1167 = sand.u32 %s174, 1
          %s1168 = smul.addr %s1167, 8
          %s1169 = scalar_lea.vmem [#allocation10], %s1168
          %1170 = dma.done %s1166, 128
        $region76: #{tpu_custom_call.1} parent=71 // pred_fallthru
          _
        // Predicated region
        $region77: #{tpu_custom_call.1} parent=71 // pred_check
          %p1171 = pneg %p215
        $region78: #{tpu_custom_call.1} parent=71 // pred_check_branch
          %1173 = sbr.rel (%p1171) target = $region80
        $region79: #{tpu_custom_call.1} parent=71 // pred_region
          %p1174 = scmp.lt.s32.totalorder %s30, 1
          %s1175 = scalar_select %p1174, %s30, 1
          %s1176 = smul.addr %s1175, 8
          %s1177 = scalar_lea.vmem %s7, %s1176
        $region80: #{tpu_custom_call.1} parent=71 // pred_fallthru
          _
      $region72: #{tpu_custom_call.1} parent=5 // pred_fallthru
        _
    $region6: #{tpu_custom_call.1} parent=1 // loop_footer
      %s28 = sadd.s32 1, %s24
    $region7: #{tpu_custom_call.1} parent=1 // loop_footer_branch
      %23 = sbr.rel target = $region3
    $region8: #{tpu_custom_call.1} parent=1 // loop_exit
      _
    %1178 = vsyncpa [#allocation3], 1
    %s1179 = scalar_lea.sflag [#allocation3], 1
    %1180 = vsyncpa %s1179, 1
    %1181 = vsyncpa [#allocation6], 1
    %s1182 = scalar_lea.sflag [#allocation6], 1
    %1183 = vsyncpa %s1182, 1
    %1184 = vsyncpa [#allocation9], 1
    %1185 = vsyncpa [#allocation4], 1
    %s1186 = scalar_lea.sflag [#allocation4], 1
    %1187 = vsyncpa %s1186, 1

</llo_original>
